<compile_context>
chip_gen: v5e
topology: v5e:2x2
jax: 0.10.0
libtpu: 0.0.40
codegen_flags: <defaults>
</compile_context>

<pallas_src>
import math

import numpy as np
import jax
import jax.numpy as jnp
from jax.experimental import pallas as pl
from jax.experimental.pallas import tpu as pltpu


# ----------------------------------------------------------------------------
# Buffer precomputation — mirrors DiscreteCosineTransform._precompute
# ----------------------------------------------------------------------------
def _plateau(length, first, middle, last=None):
    z = np.full((length,), middle, dtype=np.float64)
    z[0] = first
    if last is not None:
        z[-1] = last
    return z


def precompute_dct_matrix(dct_length, dct_type=2):
    assert 1 <= dct_length
    assert 1 <= dct_type <= 4
    # dct_type == 1 divides by (L - 1); L == 1 is undefined there (same as
    # the reference PyTorch module).
    assert not (dct_type == 1 and dct_length == 1)
    L = dct_length
    n = np.arange(L, dtype=np.float64)
    k = np.arange(L, dtype=np.float64)
    if dct_type in (2, 4):
        n = n + 0.5
    if dct_type in (3, 4):
        k = k + 0.5
    n = n * (math.pi / (L - 1 if dct_type == 1 else L))

    if dct_type == 1:
        c = (1.0 / 2.0) ** 0.5
        z0 = _plateau(L, c, 1.0, c)
        z1 = _plateau(L, 1.0, 2.0, 1.0)
        z = z0[None, :] * np.sqrt(z1 / (L - 1))[:, None]
    elif dct_type == 2:
        z = np.sqrt(_plateau(L, 1.0, 2.0) / L)[None, :]
    elif dct_type == 3:
        z = np.sqrt(_plateau(L, 1.0, 2.0) / L)[:, None]
    elif dct_type == 4:
        z = (2.0 / L) ** 0.5
    else:
        raise ValueError

    W = z * np.cos(k[None, :] * n[:, None])  # (L, L), W[n, k]
    return jnp.asarray(W, dtype=jnp.float32)


# ----------------------------------------------------------------------------
# Pallas kernel: one (tm, L) row-tile of x times one (L, tn) column-tile of W
# producing a (tm, tn) output tile.  K (the contraction dim) stays whole, so
# there is no accumulator or pl.when init/finalize.
# ----------------------------------------------------------------------------
def _make_dct_kernel(precision):
    def kernel(x_ref, w_ref, o_ref):
        o_ref[...] = jnp.dot(
            x_ref[...],
            w_ref[...],
            preferred_element_type=jnp.float32,
            precision=precision,
        ).astype(o_ref.dtype)

    return kernel


# ----------------------------------------------------------------------------
# Generation-aware sizing helpers
# ----------------------------------------------------------------------------
def _round_up(v, m):
    return ((v + m - 1) // m) * m


def _tpu_vmem_capacity_bytes():
    """Per-TensorCore VMEM capacity (v5e/v6e 128 MiB, v7x 64 MiB)."""
    cap = None
    try:
        info = pltpu.get_tpu_info()
        cap = getattr(info, "vmem_capacity_bytes", None)
    except Exception:
        cap = None
    if not cap:
        cap = 64 << 20  # conservative fallback (works on every generation)
    return int(min(max(int(cap), 32 << 20), 128 << 20))


def _vmem_bytes(tm, tn, L, x_item, w_item, o_item):
    # Pallas double-buffers every auto-pipelined operand — including W, whose
    # index_map is constant along M — so count everything at 2x (fixes the
    # under-count from the previous version).
    return 2 * (tm * L * x_item + L * tn * w_item + tm * tn * o_item)


def _choose_tiles(M, L, x_item, w_item, o_item, budget):
    # N (output-column) tile: keep the whole DCT matrix resident when its
    # double-buffered footprint fits comfortably; otherwise stream it as
    # 128-multiple column tiles (needed around L >~ 1.5-2k on v7x's 64 MiB
    # VMEM, ~3k on v5e/v6e's 128 MiB).
    if L <= 128 or 2 * L * L * w_item <= budget // 2:
        tn = L
    else:
        tn = 1024
        while tn > 128 and 2 * L * tn * w_item > budget // 2:
            tn //= 2

    # M (row) tile: target >= ~4 MiB of x+out traffic per grid step so the
    # ~0.35 us fixed per-step overhead is amortized (especially on v7x's
    # 3.2 TB/s HBM); 256-aligned for full MXU passes and clean DMAs.
    target_bytes = 4 << 20
    tm = target_bytes // max(1, L * x_item + tn * o_item)
    tm = max(256, min(8192, _round_up(tm, 256)))
    tm = max(8, min(tm, _round_up(M, 8)))  # small batches: one (ragged) block

    # Shrink tm (power-of-two-ish, always 8-aligned) until tiles fit VMEM.
    while tm > 8 and _vmem_bytes(tm, tn, L, x_item, w_item, o_item) > budget:
        tm = max(8, _round_up(tm // 2, 8))
    return tm, tn


# ----------------------------------------------------------------------------
# Wrapper: apply DCT along the last axis, y[..., k] = sum_n x[..., n] W[n, k]
# ----------------------------------------------------------------------------
def dct_apply(x, W, *, bf16_io=False):
    L = W.shape[0]
    if x.shape[-1] != L:
        raise ValueError(
            f"dimension of input ({x.shape[-1]}) must equal dct_length ({L})"
        )
    orig_shape = x.shape

    if bf16_io:
        # Halves HBM bytes (memory-bound regime) and recovers full-rate bf16
        # MXU throughput for large L; accumulation stays f32 in the kernel.
        x = x.astype(jnp.bfloat16)
        W = W.astype(jnp.bfloat16)

    xm = x.reshape(-1, L)
    M = xm.shape[0]

    x_item = jnp.dtype(xm.dtype).itemsize
    w_item = jnp.dtype(W.dtype).itemsize
    o_dtype = xm.dtype
    o_item = jnp.dtype(o_dtype).itemsize

    vmem_cap = _tpu_vmem_capacity_bytes()
    budget = (vmem_cap * 3) // 4  # ~48 MiB on v7x, ~96 MiB on v5e/v6e
    tm, tn = _choose_tiles(M, L, x_item, w_item, o_item, budget)

    grid_m = pl.cdiv(M, tm)  # ragged last M block is masked by Pallas
    grid_n = pl.cdiv(L, tn)  # ragged last N block likewise

    needed = _vmem_bytes(tm, tn, L, x_item, w_item, o_item)
    # Always pass a limit (v5e's default scoped VMEM is only 16 MiB) and
    # clamp below the physical per-core capacity (v7x: 64 MiB).
    vmem_limit = int(min(max(needed + (8 << 20), 32 << 20), vmem_cap - (4 << 20)))

    precision = (
        jax.lax.Precision.HIGHEST
        if o_dtype == jnp.float32
        else jax.lax.Precision.DEFAULT
    )

    # TODO(synk): on v7x verify in the profile that the parallel M axis is
    # actually split across both TensorCores; if one TC idles, switch it to
    # pltpu.CORE_PARALLEL.
    out = pl.pallas_call(
        _make_dct_kernel(precision),
        out_shape=jax.ShapeDtypeStruct((M, L), o_dtype),
        grid_spec=pltpu.PrefetchScalarGridSpec(
            num_scalar_prefetch=0,
            grid=(grid_m, grid_n),
            in_specs=[
                pl.BlockSpec((tm, L), lambda i, j: (i, 0)),  # x row tile
                pl.BlockSpec((L, tn), lambda i, j: (0, j)),  # W column tile
            ],
            out_specs=pl.BlockSpec((tm, tn), lambda i, j: (i, j)),
        ),
        compiler_params=pltpu.CompilerParams(
            dimension_semantics=("parallel", "parallel"),
            vmem_limit_bytes=vmem_limit,
        ),
        cost_estimate=pl.CostEstimate(
            flops=2 * M * L * L,
            bytes_accessed=M * L * x_item + L * L * w_item + M * L * o_item,
            transcendentals=0,
        ),
    )(xm, W)

    return out.reshape(orig_shape)


# ----------------------------------------------------------------------------
# Demo / correctness check
# ----------------------------------------------------------------------------
if __name__ == "__main__":
    dct_length = 16
    dct_type = 2
    W = precompute_dct_matrix(dct_length, dct_type)  # deterministic buffer

    # Case 1: small batched input (M = 8 flattened rows).
    x = jax.random.normal(jax.random.PRNGKey(0), (2, 4, dct_length),
                          dtype=jnp.float32)
    y = jax.block_until_ready(dct_apply(x, W))
    y_ref = jnp.matmul(x, W, precision=jax.lax.Precision.HIGHEST)
    assert y.shape == x.shape
    assert y.dtype == x.dtype
    assert jnp.allclose(y, y_ref, atol=1e-5, rtol=1e-5)

    # Case 2: ragged flattened batch (M = 15, not a multiple of 8) exercises
    # the masked last row block.
    x2 = jax.random.normal(jax.random.PRNGKey(1), (3, 5, dct_length),
                           dtype=jnp.float32)
    y2 = jax.block_until_ready(dct_apply(x2, W))
    y2_ref = jnp.matmul(x2, W, precision=jax.lax.Precision.HIGHEST)
    assert y2.shape == x2.shape
    assert jnp.allclose(y2, y2_ref, atol=1e-5, rtol=1e-5)

    print("KERNEL_OK")
</pallas_src>

<mosaic_0001>
module attributes {stable_mosaic.version = 11 : i64} {
  func.func @kernel(%arg0: i32, %arg1: i32, %arg2: memref<8x16xf32, #tpu.memory_space<vmem>>, %arg3: memref<16x16xf32, #tpu.memory_space<vmem>>, %arg4: memref<8x16xf32, #tpu.memory_space<vmem>>) attributes {dimension_semantics = [#tpu.dimension_semantics<parallel>, #tpu.dimension_semantics<parallel>], iteration_bounds = array<i64: 1, 1>, scalar_prefetch = 0 : i64, scratch_operands = 0 : i64, tpu.core_type = #tpu.core_type<tc>, window_params = [{transform_indices = @transform_0, window_bounds = array<i64: 8, 16>}, {transform_indices = @transform_1, window_bounds = array<i64: 16, 16>}, {transform_indices = @transform_2, window_bounds = array<i64: 8, 16>}]} {
    %c0 = arith.constant 0 : index
    %c0_0 = arith.constant 0 : index
    %0 = vector.load %arg2[%c0, %c0_0] : memref<8x16xf32, #tpu.memory_space<vmem>>, vector<8x16xf32>
    %c0_1 = arith.constant 0 : index
    %c0_2 = arith.constant 0 : index
    %1 = vector.load %arg3[%c0_1, %c0_2] : memref<16x16xf32, #tpu.memory_space<vmem>>, vector<16x16xf32>
    %cst = arith.constant dense<0.000000e+00> : vector<8x16xf32>
    %2 = tpu.matmul %0, %1, %cst {dimension_numbers = #tpu.dot_dimension_numbers<[1], [0], [0], [1], [0, 0, 1, 1], [], []>, precision = #tpu.contract_precision<fp32>} : vector<8x16xf32>, vector<16x16xf32>, vector<8x16xf32> -> vector<8x16xf32>
    %c0_3 = arith.constant 0 : index
    %c0_4 = arith.constant 0 : index
    %3 = vector.load %arg4[%c0_3, %c0_4] : memref<8x16xf32, #tpu.memory_space<vmem>>, vector<8x16xf32>
    tpu.vector_store %arg4[%c0_3, %c0_4], %2 {strides = array<i32>} : memref<8x16xf32, #tpu.memory_space<vmem>>, vector<8x16xf32>,
    return
  }
  func.func @transform_0(%arg0: i32, %arg1: i32) -> (i32, i32) {
    %c0_i32 = arith.constant 0 : i32
    %c0_i32_0 = arith.constant 0 : i32
    return %arg0, %c0_i32 : i32, i32
  }
  func.func @transform_1(%arg0: i32, %arg1: i32) -> (i32, i32) {
    %c0_i32 = arith.constant 0 : i32
    %c0_i32_0 = arith.constant 0 : i32
    return %c0_i32, %arg1 : i32, i32
  }
  func.func @transform_2(%arg0: i32, %arg1: i32) -> (i32, i32) {
    %c0_i32 = arith.constant 0 : i32
    return %arg0, %arg1 : i32, i32
  }
}

</mosaic_0001>

<llo_original>
// kernel: tpu_custom_call.1
$region0: #{tpu_custom_call.1}
  #allocation0 [shape = 'u32[]', space=smem, size = 0x4, offset = 0x4, fixed_abs, tag = 'smem constant byte address 0x4 - core index']
  #allocation1 [shape = 'u32[72,128]{1,0:T(1,128)}', space=vmem, size = 0x9000, scoped, tag = 'internal scratch']
  %s0 = inlined_call_operand.hbm [shape: f32[8,16], index: 0, kind: input, shape index: {}]
  %s1 = inlined_call_operand.hbm [shape: f32[16,16], index: 1, kind: input, shape index: {}]
  %s2 = inlined_call_operand.hbm [shape: f32[8,16], index: 2, kind: output, shape index: {}]
  %s3 = sld [smem:[#allocation0]]
  $region26: #{tpu_custom_call.1} parent=0
    _
  %s5 = ssub.s32 1, %s3
  %s6 = scalar_select 0, %s5, %s3
  $region1: #{tpu_custom_call.1} parent=0
    #allocation2 [shape = 'u8[4096]{0}', space=vmem, size = 0x1000, scoped, tag = 'input window, operand 0, single buffered']
    #allocation3 [shape = 's32[1]{0}', space=sflag, size = 0x4, scoped, tag = 'scoped memory for tpu_custom_call.1']
    #allocation4 [shape = 's32[1]{0}', space=sflag, size = 0x4, scoped, tag = 'scoped memory for tpu_custom_call.1']
    #allocation5 [shape = 'u8[8192]{0}', space=vmem, size = 0x2000, scoped, tag = 'input window, operand 1, single buffered']
    #allocation6 [shape = 's32[1]{0}', space=sflag, size = 0x4, scoped, tag = 'scoped memory for tpu_custom_call.1']
    #allocation7 [shape = 'u8[4096]{0}', space=vmem, size = 0x1000, scoped, tag = 'output window, operand 0, single buffered']
    %7 = vsyncpa [#allocation3], 0
    %8 = vsyncpa [#allocation6], 0
    %9 = vsyncpa [#allocation4], 0
    // Predicated region
    $region2: #{tpu_custom_call.1} parent=1 // pred_check
      _
    $region3: #{tpu_custom_call.1} parent=1 // pred_check_branch
      %11 = sbr.rel (0) target = $region5
    $region4: #{tpu_custom_call.1} parent=1 // pred_region
      %13 = vsyncadd [#allocation3], 0
      %s15 = sshll.u32 %s0, 4
      %s16 = int_to_ptr.hbm [resolvable:$true] %s15
      %s17 = sshll.u32 [#allocation2], 4
      %s18 = int_to_ptr.vmem [resolvable:$true] %s17
      %20 = dma.hbm_to_vmem [thread:$0]  %s16, 128, %s18, [#allocation3]
    $region5: #{tpu_custom_call.1} parent=1 // pred_fallthru
      _
    // Predicated region
    $region6: #{tpu_custom_call.1} parent=1 // pred_check
      _
    $region7: #{tpu_custom_call.1} parent=1 // pred_check_branch
      %22 = sbr.rel (0) target = $region9
    $region8: #{tpu_custom_call.1} parent=1 // pred_region
      %24 = vsyncadd [#allocation6], 0
      %s25 = sshll.u32 %s1, 4
      %s26 = int_to_ptr.hbm [resolvable:$true] %s25
      %s27 = sshll.u32 [#allocation5], 4
      %s28 = int_to_ptr.vmem [resolvable:$true] %s27
      %33 = dma.hbm_to_vmem [thread:$0]  %s26, 256, %s28, [#allocation6], 128, 128, 8
    $region9: #{tpu_custom_call.1} parent=1 // pred_fallthru
      _
    // Predicated region
    $region10: #{tpu_custom_call.1} parent=1 // pred_check
      _
    $region11: #{tpu_custom_call.1} parent=1 // pred_check_branch
      %35 = sbr.rel (0) target = $region13
    $region12: #{tpu_custom_call.1} parent=1 // pred_region
      %37 = dma.done [#allocation3], 128
    $region13: #{tpu_custom_call.1} parent=1 // pred_fallthru
      _
    // Predicated region
    $region14: #{tpu_custom_call.1} parent=1 // pred_check
      _
    $region15: #{tpu_custom_call.1} parent=1 // pred_check_branch
      %39 = sbr.rel (0) target = $region17
    $region16: #{tpu_custom_call.1} parent=1 // pred_region
      %41 = dma.done [#allocation6], 256
    $region17: #{tpu_custom_call.1} parent=1 // pred_fallthru
      _
    %v42 = vld [vmem:[#allocation2] sm:$0xff]
    %v43 = vld [vmem:[#allocation5] sm:$0xff]
    %v44 = vld [vmem:[#allocation5 + $0x8] sm:$0xff]
    %vm45 = vcmask 130048
    %v47 = vsel %vm45, %v42, 0
    %49 = vmatpush.msra.mxu0 0.0
    %50 = vmatpush.msra.mxu0 0.0
    %51 = vmatpush.msra.mxu0 0.0
    %52 = vmatpush.msra.mxu0 0.0
    %53 = vmatpush.msra.mxu0 0.0
    %54 = vmatpush.msra.mxu0 0.0
    %55 = vmatpush.msra.mxu0 0.0
    %56 = vmatpush.msra.mxu0 0.0
    %57 = vmatpush.msra.mxu0 0.0
    %58 = vmatpush.msra.mxu0 0.0
    %59 = vmatpush.msra.mxu0 0.0
    %60 = vmatpush.msra.mxu0 0.0
    %61 = vmatpush.msra.mxu0 0.0
    %62 = vmatpush.msra.mxu0 0.0
    %v63 = vand.u32 %v44, 4294901760
    %64 = vmatpush.msra.mxu0 %v63
    %v65 = vand.u32 %v43, 4294901760
    %66 = vmatpush.msra.mxu0 %v65
    %v67 = vand.u32 %v47, 4294901760
    %v68 = vsub.f32 %v47, %v67
    %v69 = vand.u32 %v68, 4294901760
    %v70 = vsub.f32 %v68, %v69
    %v71 = vand.u32 %v70, 4294901760
    %72 = vmatmul.f32.gmra.mxu0 %v71
    %v73 = vpop.f32.mrf.mxu0
    %v74 = vadd.f32 0.0, %v73
    %75 = vdwg.mxu0
    %76 = vmatpush.msra.mxu0 0.0
    %77 = vmatpush.msra.mxu0 0.0
    %78 = vmatpush.msra.mxu0 0.0
    %79 = vmatpush.msra.mxu0 0.0
    %80 = vmatpush.msra.mxu0 0.0
    %81 = vmatpush.msra.mxu0 0.0
    %82 = vmatpush.msra.mxu0 0.0
    %83 = vmatpush.msra.mxu0 0.0
    %84 = vmatpush.msra.mxu0 0.0
    %85 = vmatpush.msra.mxu0 0.0
    %86 = vmatpush.msra.mxu0 0.0
    %87 = vmatpush.msra.mxu0 0.0
    %88 = vmatpush.msra.mxu0 0.0
    %89 = vmatpush.msra.mxu0 0.0
    %v90 = vand.u32 %v44, 4294901760
    %v91 = vsub.f32 %v44, %v90
    %v92 = vand.u32 %v91, 4294901760
    %v93 = vsub.f32 %v91, %v92
    %v94 = vand.u32 %v93, 4294901760
    %95 = vmatpush.msra.mxu0 %v94
    %v96 = vand.u32 %v43, 4294901760
    %v97 = vsub.f32 %v43, %v96
    %v98 = vand.u32 %v97, 4294901760
    %v99 = vsub.f32 %v97, %v98
    %v100 = vand.u32 %v99, 4294901760
    %101 = vmatpush.msra.mxu0 %v100
    %v102 = vand.u32 %v47, 4294901760
    %103 = vmatmul.f32.gmra.mxu0 %v102
    %v104 = vpop.f32.mrf.mxu0
    %v105 = vadd.f32 %v74, %v104
    %106 = vdwg.mxu0
    %107 = vmatpush.msra.mxu0 0.0
    %108 = vmatpush.msra.mxu0 0.0
    %109 = vmatpush.msra.mxu0 0.0
    %110 = vmatpush.msra.mxu0 0.0
    %111 = vmatpush.msra.mxu0 0.0
    %112 = vmatpush.msra.mxu0 0.0
    %113 = vmatpush.msra.mxu0 0.0
    %114 = vmatpush.msra.mxu0 0.0
    %115 = vmatpush.msra.mxu0 0.0
    %116 = vmatpush.msra.mxu0 0.0
    %117 = vmatpush.msra.mxu0 0.0
    %118 = vmatpush.msra.mxu0 0.0
    %119 = vmatpush.msra.mxu0 0.0
    %120 = vmatpush.msra.mxu0 0.0
    %v121 = vand.u32 %v44, 4294901760
    %v122 = vsub.f32 %v44, %v121
    %123 = vmatpush.msra.mxu0 %v122
    %v124 = vand.u32 %v43, 4294901760
    %v125 = vsub.f32 %v43, %v124
    %126 = vmatpush.msra.mxu0 %v125
    %v127 = vand.u32 %v47, 4294901760
    %v128 = vsub.f32 %v47, %v127
    %129 = vmatmul.f32.gmra.mxu0 %v128
    %v130 = vpop.f32.mrf.mxu0
    %v131 = vadd.f32 %v105, %v130
    %132 = vdwg.mxu0
    %133 = vmatpush.msra.mxu0 0.0
    %134 = vmatpush.msra.mxu0 0.0
    %135 = vmatpush.msra.mxu0 0.0
    %136 = vmatpush.msra.mxu0 0.0
    %137 = vmatpush.msra.mxu0 0.0
    %138 = vmatpush.msra.mxu0 0.0
    %139 = vmatpush.msra.mxu0 0.0
    %140 = vmatpush.msra.mxu0 0.0
    %141 = vmatpush.msra.mxu0 0.0
    %142 = vmatpush.msra.mxu0 0.0
    %143 = vmatpush.msra.mxu0 0.0
    %144 = vmatpush.msra.mxu0 0.0
    %145 = vmatpush.msra.mxu0 0.0
    %146 = vmatpush.msra.mxu0 0.0
    %v147 = vand.u32 %v44, 4294901760
    %148 = vmatpush.msra.mxu0 %v147
    %v149 = vand.u32 %v43, 4294901760
    %150 = vmatpush.msra.mxu0 %v149
    %v151 = vand.u32 %v47, 4294901760
    %v152 = vsub.f32 %v47, %v151
    %v153 = vand.u32 %v152, 4294901760
    %154 = vmatmul.f32.gmra.mxu0 %v153
    %v155 = vpop.f32.mrf.mxu0
    %v156 = vadd.f32 %v131, %v155
    %157 = vdwg.mxu0
    %158 = vmatpush.msra.mxu0 0.0
    %159 = vmatpush.msra.mxu0 0.0
    %160 = vmatpush.msra.mxu0 0.0
    %161 = vmatpush.msra.mxu0 0.0
    %162 = vmatpush.msra.mxu0 0.0
    %163 = vmatpush.msra.mxu0 0.0
    %164 = vmatpush.msra.mxu0 0.0
    %165 = vmatpush.msra.mxu0 0.0
    %166 = vmatpush.msra.mxu0 0.0
    %167 = vmatpush.msra.mxu0 0.0
    %168 = vmatpush.msra.mxu0 0.0
    %169 = vmatpush.msra.mxu0 0.0
    %170 = vmatpush.msra.mxu0 0.0
    %171 = vmatpush.msra.mxu0 0.0
    %v172 = vand.u32 %v44, 4294901760
    %v173 = vsub.f32 %v44, %v172
    %v174 = vand.u32 %v173, 4294901760
    %175 = vmatpush.msra.mxu0 %v174
    %v176 = vand.u32 %v43, 4294901760
    %v177 = vsub.f32 %v43, %v176
    %v178 = vand.u32 %v177, 4294901760
    %179 = vmatpush.msra.mxu0 %v178
    %v180 = vand.u32 %v47, 4294901760
    %181 = vmatmul.f32.gmra.mxu0 %v180
    %v182 = vpop.f32.mrf.mxu0
    %v183 = vadd.f32 %v156, %v182
    %184 = vdwg.mxu0
    %185 = vmatpush.msra.mxu0 0.0
    %186 = vmatpush.msra.mxu0 0.0
    %187 = vmatpush.msra.mxu0 0.0
    %188 = vmatpush.msra.mxu0 0.0
    %189 = vmatpush.msra.mxu0 0.0
    %190 = vmatpush.msra.mxu0 0.0
    %191 = vmatpush.msra.mxu0 0.0
    %192 = vmatpush.msra.mxu0 0.0
    %193 = vmatpush.msra.mxu0 0.0
    %194 = vmatpush.msra.mxu0 0.0
    %195 = vmatpush.msra.mxu0 0.0
    %196 = vmatpush.msra.mxu0 0.0
    %197 = vmatpush.msra.mxu0 0.0
    %198 = vmatpush.msra.mxu0 0.0
    %v199 = vand.u32 %v44, 4294901760
    %200 = vmatpush.msra.mxu0 %v199
    %v201 = vand.u32 %v43, 4294901760
    %202 = vmatpush.msra.mxu0 %v201
    %v203 = vand.u32 %v47, 4294901760
    %204 = vmatmul.f32.gmra.mxu0 %v203
    %v205 = vpop.f32.mrf.mxu0
    %v206 = vadd.f32 %v183, %v205
    %207 = vdwg.mxu0
    %208 = vst.msk [vmem:[#allocation7] sm:$0xff] %vm45, %v206
    // Predicated region
    $region18: #{tpu_custom_call.1} parent=1 // pred_check
      _
    $region19: #{tpu_custom_call.1} parent=1 // pred_check_branch
      %210 = sbr.rel (0) target = $region21
    $region20: #{tpu_custom_call.1} parent=1 // pred_region
      %212 = vsyncadd [#allocation4], 0
      %s214 = sshll.u32 [#allocation7], 4
      %s215 = int_to_ptr.vmem [resolvable:$true] %s214
      %s216 = sshll.u32 %s2, 4
      %s217 = int_to_ptr.hbm [resolvable:$true] %s216
      %219 = dma.vmem_to_hbm [thread:$0]  %s215, 128, %s217, [#allocation4]
    $region21: #{tpu_custom_call.1} parent=1 // pred_fallthru
      _
    // Predicated region
    $region22: #{tpu_custom_call.1} parent=1 // pred_check
      _
    $region23: #{tpu_custom_call.1} parent=1 // pred_check_branch
      %221 = sbr.rel (0) target = $region25
    $region24: #{tpu_custom_call.1} parent=1 // pred_region
      %223 = dma.done [#allocation4], 128
    $region25: #{tpu_custom_call.1} parent=1 // pred_fallthru
      _
    %224 = vsyncpa [#allocation3], 1
    %225 = vsyncpa [#allocation6], 1
    %226 = vsyncpa [#allocation4], 1

</llo_original>
